<compile_context>
chip_gen: v7x
topology: tpu7x:2x2x1
jax: 0.10.0
libtpu: 0.0.40
codegen_flags: <defaults>
</compile_context>

<pallas_src>
import jax
import jax.numpy as jnp
from jax.experimental import pallas as pl
from jax.experimental.pallas import tpu as pltpu


def _round_up(x, m):
    return (x + m - 1) // m * m


def _layout(vocab, out_features):
    """Packing layout: how many logical rows share one 128-lane output row."""
    if out_features <= 128 and 128 % out_features == 0:
        pack = 128 // out_features
        lanes = 128
    else:
        pack = 1
        lanes = _round_up(out_features, 128)
    vocab_p = _round_up(vocab, 128)
    return pack, lanes, vocab_p


def build_fused_table(table, w_t, bias, channel, embed_dim):
    """Precompute the block-diagonal fused selection matrix (hoist out of the
    per-call path -- the parameters are static).

    fused[v] = table[v] @ W.T + b, replicated into `pack` diagonal blocks of a
    (pack*vocab_p, lanes) matrix so that `one_hot @ big_fused` directly yields
    `pack` logical rows packed into each 128-lane output row.
    """
    vocab, d_in = table.shape
    out_features = channel * embed_dim
    assert w_t.shape == (d_in, out_features)
    pack, lanes, vocab_p = _layout(vocab, out_features)

    fused = (
        jnp.dot(table.astype(jnp.float32), w_t.astype(jnp.float32),
                precision=jax.lax.Precision.HIGHEST)
        + jnp.asarray(bias, jnp.float32).reshape(1, out_features)
    )                                                    # (vocab, out_features)

    big = jnp.zeros((pack * vocab_p, lanes), jnp.float32)
    for j in range(pack):
        big = big.at[j * vocab_p: j * vocab_p + vocab,
                     j * out_features: (j + 1) * out_features].set(fused)
    return big


def _context_embedding_kernel(idx_ref, fused_ref, out_ref):
    """idx_ref:   VMEM (TNP, pack)          int32  pack logical-row indices / out row
       fused_ref: VMEM (pack*vocab_p, lanes) f32   block-diag fused table (resident)
       out_ref:   VMEM (TNP, lanes)          f32   lane-dense packed output block"""
    tnp, pack = idx_ref.shape
    kdim = fused_ref.shape[0]
    vocab_p = kdim // pack

    # Vectorized gather + linear: block-diagonal one-hot @ fused on the MXU.
    idx = idx_ref[...]                                          # (TNP, pack)
    col = jax.lax.broadcasted_iota(jnp.int32, (tnp, kdim), 1)
    hit = None
    for j in range(pack):                  # pack is small & static -> unrolled
        h = col == (idx[:, j:j + 1] + j * vocab_p)
        hit = h if hit is None else hit | h
    one_hot = hit.astype(fused_ref.dtype)  # exactly one 1 per logical row

    out_ref[...] = jnp.dot(one_hot, fused_ref[...],
                           preferred_element_type=jnp.float32).astype(out_ref.dtype)


def context_embedding_apply(x, fused_big, vocab, channel, embed_dim, *, block_rows=None):
    """x: (n, 1) int indices; fused_big: output of build_fused_table.
    Returns (n, channel, embed_dim) float32."""
    n = x.shape[0]
    out_features = channel * embed_dim
    pack, lanes, vocab_p = _layout(vocab, out_features)
    kdim = pack * vocab_p
    assert fused_big.shape == (kdim, lanes)

    # ---- batch tiling (logical rows; each grid step covers tn of them) ----
    row_quant = pack * 8                  # keeps the packed sublane dim % 8 == 0
    if block_rows is None:
        block_rows = 1024 if n >= 1024 else max(n, row_quant)
    tn = _round_up(block_rows, row_quant)
    n_p = _round_up(n, tn)
    tnp = tn // pack

    # Clamp (PyTorch raises on OOB; here we pin to vocab-1), pad to n_p with the
    # in-range index 0 (pad rows are sliced off), and pre-pack `pack` indices per
    # packed output row.  One tiny fused elementwise pass over x.
    idx = jnp.clip(x.reshape(n).astype(jnp.int32), 0, vocab - 1)
    idx_p = jnp.zeros((n_p,), jnp.int32).at[:n].set(idx).reshape(n_p // pack, pack)

    out = pl.pallas_call(
        _context_embedding_kernel,
        out_shape=jax.ShapeDtypeStruct((n_p // pack, lanes), jnp.float32),
        grid_spec=pltpu.PrefetchScalarGridSpec(
            num_scalar_prefetch=0,
            grid=(n_p // tn,),
            in_specs=[
                pl.BlockSpec((tnp, pack), lambda i: (i, 0)),     # packed indices
                pl.BlockSpec((kdim, lanes), lambda i: (0, 0)),   # fused table (resident)
            ],
            out_specs=pl.BlockSpec((tnp, lanes), lambda i: (i, 0)),
        ),
        compiler_params=pltpu.CompilerParams(
            dimension_semantics=("parallel",),   # batch blocks are independent
        ),
    )(idx_p, fused_big)

    if pack > 1:
        out = out.reshape(n_p, out_features)   # row-major (n_p/pack,128)==(n_p,32)
    else:
        out = out[:, :out_features]
    return out[:n].reshape(n, channel, embed_dim)


def context_embedding(x, table, w_t, bias, channel, embed_dim, *, block_rows=None):
    """One-shot convenience wrapper (prefer hoisting build_fused_table for repeated calls)."""
    fused_big = build_fused_table(table, w_t, bias, channel, embed_dim)
    return context_embedding_apply(x, fused_big, table.shape[0], channel, embed_dim,
                                   block_rows=block_rows)


if __name__ == "__main__":
    # Shapes consistent with the module: embed_shape=(17, 32) (16 pretrained rows +
    # prepended mean row, as in load_embedding), output_shape=(channel=4, embed_dim=8).
    n, vocab_pre, d_in, channel, embed_dim = 8, 16, 32, 4, 8

    key = jax.random.PRNGKey(0)
    k1, k2, k3, k4 = jax.random.split(key, 4)

    # Synthetic "pretrained" embedding + mean row at index 0 (mimics load_embedding's cat).
    pretrained = jax.random.normal(k1, (vocab_pre, d_in), jnp.float32)
    table = jnp.concatenate([pretrained.mean(axis=0, keepdims=True), pretrained], axis=0)

    # Linear parameters (torch layout: weight (out, in), bias (out,)).
    W = jax.random.normal(k2, (channel * embed_dim, d_in), jnp.float32) * 0.05
    b = jax.random.normal(k3, (channel * embed_dim,), jnp.float32) * 0.05

    # Input indices, shape (n, 1) as in the PyTorch forward.
    x = jax.random.randint(k4, (n, 1), 0, vocab_pre + 1, dtype=jnp.int32)

    # Hoisted parameter prep (static params) + kernel call.
    fused_big = build_fused_table(table, W.T, b, channel, embed_dim)
    out = context_embedding_apply(x, fused_big, table.shape[0], channel, embed_dim)
    out = jax.block_until_ready(out)

    # Pure-JAX reference of the PyTorch forward.
    emb = table[x.reshape(-1)]                                            # (n, d_in)
    ref = (jnp.dot(emb, W.T, precision=jax.lax.Precision.HIGHEST) + b
           ).reshape(n, channel, embed_dim)                               # (n, C, E)
    assert out.shape == (n, channel, embed_dim)
    assert jnp.allclose(out, ref, atol=1e-5, rtol=1e-5)

    print("KERNEL_OK")
</pallas_src>

<mosaic_0001>
module attributes {stable_mosaic.version = 11 : i64} {
  func.func @_context_embedding_kernel(%arg0: i32, %arg1: memref<8x4xi32, #tpu.memory_space<vmem>>, %arg2: memref<512x128xf32, #tpu.memory_space<vmem>>, %arg3: memref<8x128xf32, #tpu.memory_space<vmem>>) attributes {dimension_semantics = [#tpu.dimension_semantics<parallel>], iteration_bounds = array<i64: 1>, scalar_prefetch = 0 : i64, scratch_operands = 0 : i64, tpu.core_type = #tpu.core_type<tc>, window_params = [{transform_indices = @transform_0, window_bounds = array<i64: 8, 4>}, {pipeline_mode = #tpu.pipeline_mode<synchronous>, transform_indices = @transform_1, window_bounds = array<i64: 512, 128>}, {transform_indices = @transform_2, window_bounds = array<i64: 8, 128>}]} {
    %c0 = arith.constant 0 : index
    %c0_0 = arith.constant 0 : index
    %0 = vector.load %arg1[%c0, %c0_0] : memref<8x4xi32, #tpu.memory_space<vmem>>, vector<8x4xi32>
    %1 = tpu.iota {dimensions = array<i32: 1>} : vector<8x512xi32>
    %2 = vector.extract_strided_slice %0 {offsets = [0, 0], sizes = [8, 1], strides = [1, 1]} : vector<8x4xi32> to vector<8x1xi32>
    %c0_i32 = arith.constant 0 : i32
    %3 = vector.broadcast %c0_i32 : i32 to vector<8x1xi32>
    %4 = arith.addi %2, %3 : vector<8x1xi32>
    %5 = vector.broadcast %4 : vector<8x1xi32> to vector<8x512xi32>
    %6 = arith.cmpi eq, %1, %5 : vector<8x512xi32>
    %7 = vector.extract_strided_slice %0 {offsets = [0, 1], sizes = [8, 1], strides = [1, 1]} : vector<8x4xi32> to vector<8x1xi32>
    %c128_i32 = arith.constant 128 : i32
    %8 = vector.broadcast %c128_i32 : i32 to vector<8x1xi32>
    %9 = arith.addi %7, %8 : vector<8x1xi32>
    %10 = vector.broadcast %9 : vector<8x1xi32> to vector<8x512xi32>
    %11 = arith.cmpi eq, %1, %10 : vector<8x512xi32>
    %12 = arith.ori %6, %11 : vector<8x512xi1>
    %13 = vector.extract_strided_slice %0 {offsets = [0, 2], sizes = [8, 1], strides = [1, 1]} : vector<8x4xi32> to vector<8x1xi32>
    %c256_i32 = arith.constant 256 : i32
    %14 = vector.broadcast %c256_i32 : i32 to vector<8x1xi32>
    %15 = arith.addi %13, %14 : vector<8x1xi32>
    %16 = vector.broadcast %15 : vector<8x1xi32> to vector<8x512xi32>
    %17 = arith.cmpi eq, %1, %16 : vector<8x512xi32>
    %18 = arith.ori %12, %17 : vector<8x512xi1>
    %19 = vector.extract_strided_slice %0 {offsets = [0, 3], sizes = [8, 1], strides = [1, 1]} : vector<8x4xi32> to vector<8x1xi32>
    %c384_i32 = arith.constant 384 : i32
    %20 = vector.broadcast %c384_i32 : i32 to vector<8x1xi32>
    %21 = arith.addi %19, %20 : vector<8x1xi32>
    %22 = vector.broadcast %21 : vector<8x1xi32> to vector<8x512xi32>
    %23 = arith.cmpi eq, %1, %22 : vector<8x512xi32>
    %24 = arith.ori %18, %23 : vector<8x512xi1>
    %25 = arith.extui %24 : vector<8x512xi1> to vector<8x512xi32>
    %26 = arith.sitofp %25 : vector<8x512xi32> to vector<8x512xf32>
    %c0_1 = arith.constant 0 : index
    %c0_2 = arith.constant 0 : index
    %27 = vector.load %arg2[%c0_1, %c0_2] : memref<512x128xf32, #tpu.memory_space<vmem>>, vector<512x128xf32>
    %cst = arith.constant dense<0.000000e+00> : vector<8x128xf32>
    %28 = tpu.matmul %26, %27, %cst {dimension_numbers = #tpu.dot_dimension_numbers<[1], [0], [0], [1], [0, 0, 1, 1], [], []>} : vector<8x512xf32>, vector<512x128xf32>, vector<8x128xf32> -> vector<8x128xf32>
    %c0_3 = arith.constant 0 : index
    %c0_4 = arith.constant 0 : index
    %29 = vector.load %arg3[%c0_3, %c0_4] : memref<8x128xf32, #tpu.memory_space<vmem>>, vector<8x128xf32>
    tpu.vector_store %arg3[%c0_3, %c0_4], %28 {strides = array<i32>} : memref<8x128xf32, #tpu.memory_space<vmem>>, vector<8x128xf32>,
    return
  }
  func.func @transform_0(%arg0: i32) -> (i32, i32) {
    %c0_i32 = arith.constant 0 : i32
    %c0_i32_0 = arith.constant 0 : i32
    return %arg0, %c0_i32 : i32, i32
  }
  func.func @transform_1(%arg0: i32) -> (i32, i32) {
    %c0_i32 = arith.constant 0 : i32
    %c0_i32_0 = arith.constant 0 : i32
    %c0_i32_1 = arith.constant 0 : i32
    return %c0_i32, %c0_i32_0 : i32, i32
  }
  func.func @transform_2(%arg0: i32) -> (i32, i32) {
    %c0_i32 = arith.constant 0 : i32
    %c0_i32_0 = arith.constant 0 : i32
    return %arg0, %c0_i32 : i32, i32
  }
}

</mosaic_0001>

<llo_original>
// kernel: tpu_custom_call.1
$region0: #{tpu_custom_call.1}
  #allocation0 [shape = 'u32[]', space=smem, size = 0x4, offset = 0x4, fixed_abs, tag = 'smem constant byte address 0x4 - core index']
  #allocation1 [shape = 'u32[144,128]{1,0:T(1,128)}', space=vmem, size = 0x12000, scoped, tag = 'internal scratch']
  %s0 = inlined_call_operand.vmem [shape: s32[8,4], index: 0, kind: input, shape index: {}]
  %s1 = inlined_call_operand.hbm [shape: f32[512,128], index: 1, kind: input, shape index: {}]
  %s2 = inlined_call_operand.hbm [shape: f32[8,128], index: 2, kind: output, shape index: {}]
  %s3 = sld [smem:[#allocation0]]
  $region22: #{tpu_custom_call.1} parent=0
    _
  %s5 = ssub.s32 1, %s3
  %s6 = scalar_select 0, %s5, %s3
  $region1: #{tpu_custom_call.1} parent=0
    #allocation2 [shape = 'u8[262144]{0}', space=vmem, size = 0x40000, scoped, tag = 'input window, operand 1, single buffered']
    #allocation3 [shape = 's32[1]{0}', space=sflag, size = 0x4, scoped, tag = 'scoped memory for tpu_custom_call.1']
    #allocation4 [shape = 's32[1]{0}', space=sflag, size = 0x4, scoped, tag = 'scoped memory for tpu_custom_call.1']
    #allocation5 [shape = 'u8[4096]{0}', space=vmem, size = 0x1000, scoped, tag = 'output window, operand 0, single buffered']
    %7 = vsyncpa [#allocation3], 0
    %8 = vsyncpa [#allocation4], 0
    // Predicated region
    $region2: #{tpu_custom_call.1} parent=1 // pred_check
      _
    $region3: #{tpu_custom_call.1} parent=1 // pred_check_branch
      %10 = sbr.rel (0) target = $region5
    $region4: #{tpu_custom_call.1} parent=1 // pred_region
      _
    $region5: #{tpu_custom_call.1} parent=1 // pred_fallthru
      _
    // Predicated region
    $region6: #{tpu_custom_call.1} parent=1 // pred_check
      _
    $region7: #{tpu_custom_call.1} parent=1 // pred_check_branch
      %12 = sbr.rel (0) target = $region9
    $region8: #{tpu_custom_call.1} parent=1 // pred_region
      %s14 = ssub.s32 8192, 8192
      %15 = vsyncadd [#allocation3], %s14
      %s16 = sshll.u32 [#allocation2], 4
      %s17 = int_to_ptr.vmem [resolvable:$true] %s16
      %22 = dma.hbm_to_vmem [thread:$0]  %s1, 8192, %s17, [#allocation3], 128, 128, 8
    $region9: #{tpu_custom_call.1} parent=1 // pred_fallthru
      _
    // Predicated region
    $region10: #{tpu_custom_call.1} parent=1 // pred_check
      _
    $region11: #{tpu_custom_call.1} parent=1 // pred_check_branch
      %24 = sbr.rel (0) target = $region13
    $region12: #{tpu_custom_call.1} parent=1 // pred_region
      %25 = dma.done [#allocation3], 8192
    $region13: #{tpu_custom_call.1} parent=1 // pred_fallthru
      _
    %v26 = vld [vmem:[%s0] sm:$0xff]
    %v27 = vlaneseq
    %v28 = vand.u32 %v27, 127
    %v29 = vadd.s32 %v28, 128
    %v30 = vadd.s32 %v28, 256
    %v31 = vadd.s32 %v28, 384
    %32 = vset.pattern.permute.xlu0 0
    %33 = vperm.xlu0 %32, %v26
    %v34 = vpop.permute.xlu0 %33
    %vm35 = vcmp.eq.s32.totalorder %v28, %v34
    %vm36 = vcmp.eq.s32.totalorder %v29, %v34
    %vm37 = vcmp.eq.s32.totalorder %v30, %v34
    %vm38 = vcmp.eq.s32.totalorder %v31, %v34
    %v39 = vadd.s32 %v26, 128
    %40 = vset.pattern.permute.xlu0 1
    %41 = vperm.xlu0 %40, %v39
    %v42 = vpop.permute.xlu0 %41
    %vm43 = vcmp.eq.s32.totalorder %v28, %v42
    %vm44 = vcmp.eq.s32.totalorder %v29, %v42
    %vm45 = vcmp.eq.s32.totalorder %v30, %v42
    %vm46 = vcmp.eq.s32.totalorder %v31, %v42
    %vm47 = vmor %vm35, %vm43
    %vm48 = vmor %vm36, %vm44
    %vm49 = vmor %vm37, %vm45
    %vm50 = vmor %vm38, %vm46
    %v51 = vadd.s32 %v26, 256
    %52 = vset.pattern.permute.xlu0 2
    %53 = vperm.xlu0 %52, %v51
    %v54 = vpop.permute.xlu0 %53
    %vm55 = vcmp.eq.s32.totalorder %v28, %v54
    %vm56 = vcmp.eq.s32.totalorder %v29, %v54
    %vm57 = vcmp.eq.s32.totalorder %v30, %v54
    %vm58 = vcmp.eq.s32.totalorder %v31, %v54
    %vm59 = vmor %vm47, %vm55
    %vm60 = vmor %vm48, %vm56
    %vm61 = vmor %vm49, %vm57
    %vm62 = vmor %vm50, %vm58
    %v63 = vadd.s32 %v26, 384
    %64 = vset.pattern.permute.xlu0 3
    %65 = vperm.xlu0 %64, %v63
    %v66 = vpop.permute.xlu0 %65
    %vm67 = vcmp.eq.s32.totalorder %v28, %v66
    %vm68 = vcmp.eq.s32.totalorder %v29, %v66
    %vm69 = vcmp.eq.s32.totalorder %v30, %v66
    %vm70 = vcmp.eq.s32.totalorder %v31, %v66
    %vm71 = vmor %vm59, %vm67
    %vm72 = vmor %vm60, %vm68
    %vm73 = vmor %vm61, %vm69
    %vm74 = vmor %vm62, %vm70
    %v75 = vsel %vm71, 1, 0
    %v76 = vsel %vm72, 1, 0
    %v77 = vsel %vm73, 1, 0
    %v78 = vsel %vm74, 1, 0
    %v79 = vcvt.s32.f32 %v75
    %v80 = vcvt.s32.f32 %v76
    %v81 = vcvt.s32.f32 %v77
    %v82 = vcvt.s32.f32 %v78
    %v83 = vld [vmem:[#allocation2] sm:$0xff]
    %v84 = vld [vmem:[#allocation2 + $0x8] sm:$0xff]
    %v85 = vld [vmem:[#allocation2 + $0x10] sm:$0xff]
    %v86 = vld [vmem:[#allocation2 + $0x18] sm:$0xff]
    %v87 = vld [vmem:[#allocation2 + $0x20] sm:$0xff]
    %v88 = vld [vmem:[#allocation2 + $0x28] sm:$0xff]
    %v89 = vld [vmem:[#allocation2 + $0x30] sm:$0xff]
    %v90 = vld [vmem:[#allocation2 + $0x38] sm:$0xff]
    %v91 = vld [vmem:[#allocation2 + $0x40] sm:$0xff]
    %v92 = vld [vmem:[#allocation2 + $0x48] sm:$0xff]
    %v93 = vld [vmem:[#allocation2 + $0x50] sm:$0xff]
    %v94 = vld [vmem:[#allocation2 + $0x58] sm:$0xff]
    %v95 = vld [vmem:[#allocation2 + $0x60] sm:$0xff]
    %v96 = vld [vmem:[#allocation2 + $0x68] sm:$0xff]
    %v97 = vld [vmem:[#allocation2 + $0x70] sm:$0xff]
    %v98 = vld [vmem:[#allocation2 + $0x78] sm:$0xff]
    %v99 = vld [vmem:[#allocation2 + $0x80] sm:$0xff]
    %v100 = vld [vmem:[#allocation2 + $0x88] sm:$0xff]
    %v101 = vld [vmem:[#allocation2 + $0x90] sm:$0xff]
    %v102 = vld [vmem:[#allocation2 + $0x98] sm:$0xff]
    %v103 = vld [vmem:[#allocation2 + $0xa0] sm:$0xff]
    %v104 = vld [vmem:[#allocation2 + $0xa8] sm:$0xff]
    %v105 = vld [vmem:[#allocation2 + $0xb0] sm:$0xff]
    %v106 = vld [vmem:[#allocation2 + $0xb8] sm:$0xff]
    %v107 = vld [vmem:[#allocation2 + $0xc0] sm:$0xff]
    %v108 = vld [vmem:[#allocation2 + $0xc8] sm:$0xff]
    %v109 = vld [vmem:[#allocation2 + $0xd0] sm:$0xff]
    %v110 = vld [vmem:[#allocation2 + $0xd8] sm:$0xff]
    %v111 = vld [vmem:[#allocation2 + $0xe0] sm:$0xff]
    %v112 = vld [vmem:[#allocation2 + $0xe8] sm:$0xff]
    %v113 = vld [vmem:[#allocation2 + $0xf0] sm:$0xff]
    %v114 = vld [vmem:[#allocation2 + $0xf8] sm:$0xff]
    %v115 = vld [vmem:[#allocation2 + $0x100] sm:$0xff]
    %v116 = vld [vmem:[#allocation2 + $0x108] sm:$0xff]
    %v117 = vld [vmem:[#allocation2 + $0x110] sm:$0xff]
    %v118 = vld [vmem:[#allocation2 + $0x118] sm:$0xff]
    %v119 = vld [vmem:[#allocation2 + $0x120] sm:$0xff]
    %v120 = vld [vmem:[#allocation2 + $0x128] sm:$0xff]
    %v121 = vld [vmem:[#allocation2 + $0x130] sm:$0xff]
    %v122 = vld [vmem:[#allocation2 + $0x138] sm:$0xff]
    %v123 = vld [vmem:[#allocation2 + $0x140] sm:$0xff]
    %v124 = vld [vmem:[#allocation2 + $0x148] sm:$0xff]
    %v125 = vld [vmem:[#allocation2 + $0x150] sm:$0xff]
    %v126 = vld [vmem:[#allocation2 + $0x158] sm:$0xff]
    %v127 = vld [vmem:[#allocation2 + $0x160] sm:$0xff]
    %v128 = vld [vmem:[#allocation2 + $0x168] sm:$0xff]
    %v129 = vld [vmem:[#allocation2 + $0x170] sm:$0xff]
    %v130 = vld [vmem:[#allocation2 + $0x178] sm:$0xff]
    %v131 = vld [vmem:[#allocation2 + $0x180] sm:$0xff]
    %v132 = vld [vmem:[#allocation2 + $0x188] sm:$0xff]
    %v133 = vld [vmem:[#allocation2 + $0x190] sm:$0xff]
    %v134 = vld [vmem:[#allocation2 + $0x198] sm:$0xff]
    %v135 = vld [vmem:[#allocation2 + $0x1a0] sm:$0xff]
    %v136 = vld [vmem:[#allocation2 + $0x1a8] sm:$0xff]
    %v137 = vld [vmem:[#allocation2 + $0x1b0] sm:$0xff]
    %v138 = vld [vmem:[#allocation2 + $0x1b8] sm:$0xff]
    %v139 = vld [vmem:[#allocation2 + $0x1c0] sm:$0xff]
    %v140 = vld [vmem:[#allocation2 + $0x1c8] sm:$0xff]
    %v141 = vld [vmem:[#allocation2 + $0x1d0] sm:$0xff]
    %v142 = vld [vmem:[#allocation2 + $0x1d8] sm:$0xff]
    %v143 = vld [vmem:[#allocation2 + $0x1e0] sm:$0xff]
    %v144 = vld [vmem:[#allocation2 + $0x1e8] sm:$0xff]
    %v145 = vld [vmem:[#allocation2 + $0x1f0] sm:$0xff]
    %v146 = vld [vmem:[#allocation2 + $0x1f8] sm:$0xff]
    %147 = vmatprep.subr.mxu0 0.0
    %148 = vmatpush1.msra.mxu0 %v83
    %149 = vmatprep.subr.mxu0 0.0
    %150 = vmatpush1.msra.mxu0 %v84
    %151 = vmatprep.subr.mxu0 0.0
    %152 = vmatpush1.msra.mxu0 %v85
    %153 = vmatprep.subr.mxu0 0.0
    %154 = vmatpush1.msra.mxu0 %v86
    %155 = vmatprep.subr.mxu0 0.0
    %156 = vmatpush1.msra.mxu0 %v87
    %157 = vmatprep.subr.mxu0 0.0
    %158 = vmatpush1.msra.mxu0 %v88
    %159 = vmatprep.subr.mxu0 0.0
    %160 = vmatpush1.msra.mxu0 %v89
    %161 = vmatprep.subr.mxu0 0.0
    %162 = vmatpush1.msra.mxu0 %v90
    %163 = vmatprep.subr.mxu0 0.0
    %164 = vmatpush1.msra.mxu0 %v91
    %165 = vmatprep.subr.mxu0 0.0
    %166 = vmatpush1.msra.mxu0 %v92
    %167 = vmatprep.subr.mxu0 0.0
    %168 = vmatpush1.msra.mxu0 %v93
    %169 = vmatprep.subr.mxu0 0.0
    %170 = vmatpush1.msra.mxu0 %v94
    %171 = vmatprep.subr.mxu0 0.0
    %172 = vmatpush1.msra.mxu0 %v95
    %173 = vmatprep.subr.mxu0 0.0
    %174 = vmatpush1.msra.mxu0 %v96
    %175 = vmatprep.subr.mxu0 0.0
    %176 = vmatpush1.msra.mxu0 %v97
    %177 = vmatprep.subr.mxu0 0.0
    %178 = vmatpush1.msra.mxu0 %v98
    %179 = vmatprep.subr.mxu0 0.0
    %180 = vmatpush1.msra.mxu0 %v99
    %181 = vmatprep.subr.mxu0 0.0
    %182 = vmatpush1.msra.mxu0 %v100
    %183 = vmatprep.subr.mxu0 0.0
    %184 = vmatpush1.msra.mxu0 %v101
    %185 = vmatprep.subr.mxu0 0.0
    %186 = vmatpush1.msra.mxu0 %v102
    %187 = vmatprep.subr.mxu0 0.0
    %188 = vmatpush1.msra.mxu0 %v103
    %189 = vmatprep.subr.mxu0 0.0
    %190 = vmatpush1.msra.mxu0 %v104
    %191 = vmatprep.subr.mxu0 0.0
    %192 = vmatpush1.msra.mxu0 %v105
    %193 = vmatprep.subr.mxu0 0.0
    %194 = vmatpush1.msra.mxu0 %v106
    %195 = vmatprep.subr.mxu0 0.0
    %196 = vmatpush1.msra.mxu0 %v107
    %197 = vmatprep.subr.mxu0 0.0
    %198 = vmatpush1.msra.mxu0 %v108
    %199 = vmatprep.subr.mxu0 0.0
    %200 = vmatpush1.msra.mxu0 %v109
    %201 = vmatprep.subr.mxu0 0.0
    %202 = vmatpush1.msra.mxu0 %v110
    %203 = vmatprep.subr.mxu0 0.0
    %204 = vmatpush1.msra.mxu0 %v111
    %205 = vmatprep.subr.mxu0 0.0
    %206 = vmatpush1.msra.mxu0 %v112
    %207 = vmatprep.subr.mxu0 0.0
    %208 = vmatpush1.msra.mxu0 %v113
    %209 = vmatprep.subr.mxu0 0.0
    %210 = vmatpush1.msra.mxu0 %v114
    %211 = vmatprep.mubr.f32.mxu0 %v80
    %212 = vmatmul.mubr.f32.gmra.mrb[0].mxu0 %v79
    %v213 = vpop.f32.mrb[0].mxu0
    %v214 = vadd.f32 0.0, %v213
    %v215 = vpop.f32.mrb[0].mxu0
    %216 = vdwg.mxu0
    %217 = vmatprep.subr.mxu0 0.0
    %218 = vmatpush1.msra.mxu0 %v115
    %219 = vmatprep.subr.mxu0 0.0
    %220 = vmatpush1.msra.mxu0 %v116
    %221 = vmatprep.subr.mxu0 0.0
    %222 = vmatpush1.msra.mxu0 %v117
    %223 = vmatprep.subr.mxu0 0.0
    %224 = vmatpush1.msra.mxu0 %v118
    %225 = vmatprep.subr.mxu0 0.0
    %226 = vmatpush1.msra.mxu0 %v119
    %227 = vmatprep.subr.mxu0 0.0
    %228 = vmatpush1.msra.mxu0 %v120
    %229 = vmatprep.subr.mxu0 0.0
    %230 = vmatpush1.msra.mxu0 %v121
    %231 = vmatprep.subr.mxu0 0.0
    %232 = vmatpush1.msra.mxu0 %v122
    %233 = vmatprep.subr.mxu0 0.0
    %234 = vmatpush1.msra.mxu0 %v123
    %235 = vmatprep.subr.mxu0 0.0
    %236 = vmatpush1.msra.mxu0 %v124
    %237 = vmatprep.subr.mxu0 0.0
    %238 = vmatpush1.msra.mxu0 %v125
    %239 = vmatprep.subr.mxu0 0.0
    %240 = vmatpush1.msra.mxu0 %v126
    %241 = vmatprep.subr.mxu0 0.0
    %242 = vmatpush1.msra.mxu0 %v127
    %243 = vmatprep.subr.mxu0 0.0
    %244 = vmatpush1.msra.mxu0 %v128
    %245 = vmatprep.subr.mxu0 0.0
    %246 = vmatpush1.msra.mxu0 %v129
    %247 = vmatprep.subr.mxu0 0.0
    %248 = vmatpush1.msra.mxu0 %v130
    %249 = vmatprep.subr.mxu0 0.0
    %250 = vmatpush1.msra.mxu0 %v131
    %251 = vmatprep.subr.mxu0 0.0
    %252 = vmatpush1.msra.mxu0 %v132
    %253 = vmatprep.subr.mxu0 0.0
    %254 = vmatpush1.msra.mxu0 %v133
    %255 = vmatprep.subr.mxu0 0.0
    %256 = vmatpush1.msra.mxu0 %v134
    %257 = vmatprep.subr.mxu0 0.0
    %258 = vmatpush1.msra.mxu0 %v135
    %259 = vmatprep.subr.mxu0 0.0
    %260 = vmatpush1.msra.mxu0 %v136
    %261 = vmatprep.subr.mxu0 0.0
    %262 = vmatpush1.msra.mxu0 %v137
    %263 = vmatprep.subr.mxu0 0.0
    %264 = vmatpush1.msra.mxu0 %v138
    %265 = vmatprep.subr.mxu0 0.0
    %266 = vmatpush1.msra.mxu0 %v139
    %267 = vmatprep.subr.mxu0 0.0
    %268 = vmatpush1.msra.mxu0 %v140
    %269 = vmatprep.subr.mxu0 0.0
    %270 = vmatpush1.msra.mxu0 %v141
    %271 = vmatprep.subr.mxu0 0.0
    %272 = vmatpush1.msra.mxu0 %v142
    %273 = vmatprep.subr.mxu0 0.0
    %274 = vmatpush1.msra.mxu0 %v143
    %275 = vmatprep.subr.mxu0 0.0
    %276 = vmatpush1.msra.mxu0 %v144
    %277 = vmatprep.subr.mxu0 0.0
    %278 = vmatpush1.msra.mxu0 %v145
    %279 = vmatprep.subr.mxu0 0.0
    %280 = vmatpush1.msra.mxu0 %v146
    %281 = vmatprep.mubr.f32.mxu0 %v82
    %282 = vmatmul.mubr.f32.gmra.mrb[0].mxu0 %v81
    %v283 = vpop.f32.mrb[0].mxu0
    %v284 = vadd.f32 %v214, %v283
    %v285 = vpop.f32.mrb[0].mxu0
    %286 = vdwg.mxu0
    %287 = vst [vmem:[#allocation5] sm:$0xff] %v284
    // Predicated region
    $region14: #{tpu_custom_call.1} parent=1 // pred_check
      _
    $region15: #{tpu_custom_call.1} parent=1 // pred_check_branch
      %289 = sbr.rel (0) target = $region17
    $region16: #{tpu_custom_call.1} parent=1 // pred_region
      %s291 = ssub.s32 128, 128
      %292 = vsyncadd [#allocation4], %s291
      %s294 = sshll.u32 [#allocation5], 4
      %s295 = int_to_ptr.vmem [resolvable:$true] %s294
      %297 = dma.vmem_to_hbm [thread:$0]  %s295, 128, %s2, [#allocation4]
    $region17: #{tpu_custom_call.1} parent=1 // pred_fallthru
      _
    // Predicated region
    $region18: #{tpu_custom_call.1} parent=1 // pred_check
      _
    $region19: #{tpu_custom_call.1} parent=1 // pred_check_branch
      %299 = sbr.rel (0) target = $region21
    $region20: #{tpu_custom_call.1} parent=1 // pred_region
      %300 = dma.done [#allocation4], 128
    $region21: #{tpu_custom_call.1} parent=1 // pred_fallthru
      _
    %301 = vsyncpa [#allocation3], 1
    %302 = vsyncpa [#allocation4], 1

</llo_original>
